<compile_context>
chip_gen: v7x
topology: tpu7x:2x2x1
jax: 0.10.0
libtpu: 0.0.40
codegen_flags: <defaults>
</compile_context>

<pallas_src>
import functools

import jax
import jax.numpy as jnp
from jax.experimental import pallas as pl
from jax.experimental.pallas import tpu as pltpu

LANES = 128
MAX_TM = 4096               # row-tile cap: 2 MiB per input per grid step (f32)
CHUNK_ROWS = 1024           # rows per in-kernel elementwise chunk
ACC_SUBLANES = 8            # VMEM vector accumulator shape (8, 128)
SMALL_N_FAST_PATH = 65536   # below this, plain jnp (launch overhead dominates)


def _sq_log_diff(p, a):
    d = jnp.log1p(p.astype(jnp.float32)) - jnp.log1p(a.astype(jnp.float32))
    return d * d


def _fold_into_acc(acc_ref, d2, rows):
    """(rows, 128) -> (8, 128) with plain VPU vreg adds; accumulate in VMEM."""
    acc_ref[...] += jnp.sum(
        d2.reshape(rows // ACC_SUBLANES, ACC_SUBLANES, LANES), axis=0)


def _rmsle_kernel(pred_ref, actual_ref, out_ref, acc_ref, *,
                  n_rows, blocks_per_split):
    c = pl.program_id(0)          # parallel split (megacore shard)
    i = pl.program_id(1)          # sequential reduction within the split
    block_idx = c * blocks_per_split + i

    tm = pred_ref.shape[0]
    total_blocks = -(-n_rows // tm)
    last_block = total_blocks - 1
    valid_last = n_rows - last_block * tm     # real rows in the last block
    has_partial = valid_last != tm            # trace-time constant
    chunk = CHUNK_ROWS if (tm % CHUNK_ROWS == 0 and tm > CHUNK_ROWS) else tm

    @pl.when(i == 0)
    def _():
        acc_ref[...] = jnp.zeros_like(acc_ref)

    def accum_full():
        # Hot path: no masking, chunked so temps stay small.
        n_chunks = tm // chunk

        def one(start):
            d2 = _sq_log_diff(pred_ref[pl.ds(start, chunk), :],
                              actual_ref[pl.ds(start, chunk), :])
            _fold_into_acc(acc_ref, d2, chunk)

        if n_chunks == 1:
            one(0)
        else:
            def body(ci, carry):
                one(pl.multiple_of(ci * chunk, chunk))
                return carry
            jax.lax.fori_loop(0, n_chunks, body, 0, unroll=True)

    def accum_partial():
        # Only the single genuinely-partial tail block runs this.  Chunks that
        # lie entirely past the real data are dropped at trace time; only the
        # straddling chunk carries a row mask.  Rows past `valid_last` hold
        # stale/undefined VMEM (log1p may produce NaN there), so the mask must
        # stay a select (jnp.where), never a multiply-by-0.
        for start in range(0, tm, chunk):
            if start >= valid_last:
                break
            d2 = _sq_log_diff(pred_ref[pl.ds(start, chunk), :],
                              actual_ref[pl.ds(start, chunk), :])
            if start + chunk > valid_last:
                row = jax.lax.broadcasted_iota(jnp.int32, (chunk, LANES), 0)
                d2 = jnp.where(row < (valid_last - start), d2, 0.0)
            _fold_into_acc(acc_ref, d2, chunk)

    if has_partial:
        @pl.when(block_idx < last_block)
        def _():
            accum_full()

        @pl.when(block_idx == last_block)
        def _():
            accum_partial()
        # block_idx > last_block: clamped duplicate tile -> skip compute.
    else:
        @pl.when(block_idx <= last_block)
        def _():
            accum_full()

    @pl.when(i == pl.num_programs(1) - 1)
    def _():
        # Single full cross-lane/sublane reduce, once per split.
        out_ref[0, 0] = jnp.sum(acc_ref[...])


def _rmsle_jnp(pred, actual):
    return jnp.sqrt(jnp.mean(_sq_log_diff(pred, actual)))


def rmsle_loss(pred, actual, *, max_tm=MAX_TM,
               small_n_threshold=SMALL_N_FAST_PATH):
    assert pred.shape == actual.shape, "pred/actual must have the same shape"
    n = int(pred.size)
    assert n > 0

    # Small-n fast path (also covers n < 128).
    if n < max(small_n_threshold, LANES):
        return _rmsle_jnp(pred, actual)

    p_flat = pred.reshape(-1)
    a_flat = actual.reshape(-1)

    rows = n // LANES
    n_main = rows * LANES

    # No full-array jnp.pad.  For n % 128 == 0 the reshape below is free; for
    # ragged n the kernel gets the first rows*128 elements and the <128-element
    # tail is folded in here with plain jnp.
    if n_main != n:
        rem_sum = jnp.sum(_sq_log_diff(p_flat[n_main:], a_flat[n_main:]))
        p_flat = p_flat[:n_main]
        a_flat = a_flat[:n_main]
    else:
        rem_sum = jnp.float32(0.0)

    p2 = p_flat.reshape(rows, LANES)
    a2 = a_flat.reshape(rows, LANES)

    # Sublane granularity by dtype packing: f32 -> 8, bf16/f16 -> 16, int8 -> 32.
    itemsize = jnp.dtype(pred.dtype).itemsize
    sub = 8 * max(1, 4 // itemsize)
    tm = min(max_tm, ((rows + sub - 1) // sub) * sub)

    total_blocks = -(-rows // tm)
    # Leading "parallel" axis: shard the reduction across TensorCores (v7x has
    # 2).  Only used when the grid is large enough that the (at most one)
    # clamped duplicate tile is noise; otherwise keep a single split.
    n_split = 2 if total_blocks >= 4 else 1
    bps = -(-total_blocks // n_split)     # blocks per split
    last_block = total_blocks - 1

    def in_map(c, i):
        # Splits that run past the data re-read the last block; the kernel
        # skips compute for those duplicates via pl.when.
        return (jnp.minimum(c * bps + i, last_block), 0)

    kernel = functools.partial(_rmsle_kernel, n_rows=rows, blocks_per_split=bps)

    partial_sums = pl.pallas_call(
        kernel,
        out_shape=jax.ShapeDtypeStruct((n_split, 1), jnp.float32),
        grid_spec=pltpu.PrefetchScalarGridSpec(
            num_scalar_prefetch=0,
            grid=(n_split, bps),
            in_specs=[
                pl.BlockSpec((tm, LANES), in_map),
                pl.BlockSpec((tm, LANES), in_map),
            ],
            out_specs=pl.BlockSpec((1, 1), lambda c, i: (c, 0),
                                   memory_space=pltpu.MemorySpace.SMEM),
            scratch_shapes=[pltpu.VMEM((ACC_SUBLANES, LANES), jnp.float32)],
        ),
        compiler_params=pltpu.CompilerParams(
            dimension_semantics=("parallel", "arbitrary"),
            vmem_limit_bytes=32 * 1024 * 1024,
        ),
        cost_estimate=pl.CostEstimate(
            flops=3 * n,
            transcendentals=2 * n,
            bytes_accessed=2 * n * itemsize + 8,
        ),
    )(p2, a2)

    total = jnp.sum(partial_sums) + rem_sum
    return jnp.sqrt(total / jnp.float32(n))


if __name__ == "__main__":
    key = jax.random.PRNGKey(0)

    # Primary training shape (tiny -> jnp fast path), a ragged tiny shape
    # (partial block + <128-element tail), larger shapes exercising the kernel
    # (multi-chunk, remainder fold), and one shape large enough to exercise the
    # 2-way parallel split with a clamped duplicate block.
    shapes = [
        (2, 4, 16, 16),
        (3, 5, 7, 11),
        (4, 16, 64, 64),
        (7, 13, 33, 31),
        (2, 1125, 1024),
    ]

    ok = True
    for shape in shapes:
        key, k1, k2 = jax.random.split(key, 3)
        # RMSLE assumes pred, actual >= 0 so log(x+1) is defined.
        pred = jax.random.uniform(k1, shape, dtype=jnp.float32,
                                  minval=0.0, maxval=5.0)
        actual = jax.random.uniform(k2, shape, dtype=jnp.float32,
                                    minval=0.0, maxval=5.0)

        # Pure-JAX reference (torch semantics).
        ref = jnp.sqrt(jnp.mean(
            (jnp.log(pred + 1.0) - jnp.log(actual + 1.0)) ** 2))

        # Default dispatch (tiny shapes take the fused jnp fast path) ...
        loss_auto = jax.block_until_ready(rmsle_loss(pred, actual))
        # ... and force the Pallas kernel path regardless of size.
        loss_kernel = jax.block_until_ready(
            rmsle_loss(pred, actual, small_n_threshold=0))

        for name, loss in (("auto", loss_auto), ("kernel", loss_kernel)):
            if not jnp.allclose(loss, ref, rtol=3e-5, atol=1e-6):
                ok = False
                print("MISMATCH", name, shape, float(loss), float(ref))

    if ok:
        print("KERNEL_OK")
</pallas_src>

<mosaic_0001>
module attributes {stable_mosaic.version = 11 : i64} {
  func.func @_rmsle_kernel(%arg0: i32, %arg1: i32, %arg2: memref<16x128xf32, #tpu.memory_space<vmem>>, %arg3: memref<16x128xf32, #tpu.memory_space<vmem>>, %arg4: memref<1x1xf32, #tpu.memory_space<smem>>, %arg5: memref<8x128xf32, #tpu.memory_space<vmem>>) attributes {dimension_semantics = [#tpu.dimension_semantics<parallel>, #tpu.dimension_semantics<arbitrary>], iteration_bounds = array<i64: 1, 1>, scalar_prefetch = 0 : i64, scratch_operands = 1 : i64, tpu.core_type = #tpu.core_type<tc>, window_params = [{transform_indices = @transform_0, window_bounds = array<i64: 16, 128>}, {transform_indices = @transform_1, window_bounds = array<i64: 16, 128>}, {transform_indices = @transform_2, window_bounds = array<i64: 1, 1>}]} {
    %c1_i32 = arith.constant 1 : i32
    %0 = arith.muli %arg0, %c1_i32 : i32
    %1 = arith.addi %0, %arg1 : i32
    %c0_i32 = arith.constant 0 : i32
    %2 = arith.cmpi eq, %arg1, %c0_i32 : i32
    %3 = arith.extui %2 : i1 to i32
    %c0_i32_0 = arith.constant 0 : i32
    %4 = arith.cmpi ne, %3, %c0_i32_0 : i32
    scf.if %4 {
      %cst = arith.constant 0.000000e+00 : f32
      %11 = vector.broadcast %cst : f32 to vector<8x128xf32>
      %c0 = arith.constant 0 : index
      %c0_5 = arith.constant 0 : index
      %12 = vector.load %arg5[%c0, %c0_5] : memref<8x128xf32, #tpu.memory_space<vmem>>, vector<8x128xf32>
      tpu.vector_store %arg5[%c0, %c0_5], %11 {strides = array<i32>} : memref<8x128xf32, #tpu.memory_space<vmem>>, vector<8x128xf32>,
    } else {
    }
    %c0_i32_1 = arith.constant 0 : i32
    %5 = arith.cmpi sle, %1, %c0_i32_1 : i32
    %6 = arith.extui %5 : i1 to i32
    %c0_i32_2 = arith.constant 0 : i32
    %7 = arith.cmpi ne, %6, %c0_i32_2 : i32
    scf.if %7 {
      %c0 = arith.constant 0 : index
      %c0_5 = arith.constant 0 : index
      %11 = vector.load %arg2[%c0, %c0_5] : memref<16x128xf32, #tpu.memory_space<vmem>>, vector<16x128xf32>
      %c0_6 = arith.constant 0 : index
      %c0_7 = arith.constant 0 : index
      %12 = vector.load %arg3[%c0_6, %c0_7] : memref<16x128xf32, #tpu.memory_space<vmem>>, vector<16x128xf32>
      %13 = math.log1p %11 : vector<16x128xf32>
      %14 = math.log1p %12 : vector<16x128xf32>
      %15 = arith.subf %13, %14 : vector<16x128xf32>
      %16 = arith.mulf %15, %15 : vector<16x128xf32>
      %c0_8 = arith.constant 0 : index
      %c0_9 = arith.constant 0 : index
      %17 = vector.load %arg5[%c0_8, %c0_9] : memref<8x128xf32, #tpu.memory_space<vmem>>, vector<8x128xf32>
      %18 = vector.shape_cast %16 : vector<16x128xf32> to vector<2x8x128xf32>
      %cst = arith.constant dense<0.000000e+00> : vector<8x128xf32>
      %19 = vector.multi_reduction <add>, %18, %cst [0] : vector<2x8x128xf32> to vector<8x128xf32>
      %20 = arith.addf %17, %19 : vector<8x128xf32>
      %c0_10 = arith.constant 0 : index
      %c0_11 = arith.constant 0 : index
      %21 = vector.load %arg5[%c0_10, %c0_11] : memref<8x128xf32, #tpu.memory_space<vmem>>, vector<8x128xf32>
      tpu.vector_store %arg5[%c0_10, %c0_11], %20 {strides = array<i32>} : memref<8x128xf32, #tpu.memory_space<vmem>>, vector<8x128xf32>,
    } else {
    }
    %c0_i32_3 = arith.constant 0 : i32
    %8 = arith.cmpi eq, %arg1, %c0_i32_3 : i32
    %9 = arith.extui %8 : i1 to i32
    %c0_i32_4 = arith.constant 0 : i32
    %10 = arith.cmpi ne, %9, %c0_i32_4 : i32
    scf.if %10 {
      %c0 = arith.constant 0 : index
      %c0_5 = arith.constant 0 : index
      %11 = vector.load %arg5[%c0, %c0_5] : memref<8x128xf32, #tpu.memory_space<vmem>>, vector<8x128xf32>
      %12 = vector.shape_cast %11 : vector<8x128xf32> to vector<1x8x128xf32>
      %cst = arith.constant dense<0.000000e+00> : vector<1xf32>
      %13 = vector.multi_reduction <add>, %12, %cst [1, 2] : vector<1x8x128xf32> to vector<1xf32>
      %14 = vector.shape_cast %13 : vector<1xf32> to vector<1x1x1xf32>
      %15 = vector.extract %14[0, 0, 0] : f32 from vector<1x1x1xf32>
      %c0_6 = arith.constant 0 : index
      %c0_7 = arith.constant 0 : index
      %16 = memref.load %arg4[%c0_6, %c0_7] : memref<1x1xf32, #tpu.memory_space<smem>>
      memref.store %15, %arg4[%c0_6, %c0_7] : memref<1x1xf32, #tpu.memory_space<smem>>
    } else {
    }
    return
  }
  func.func @transform_0(%arg0: i32, %arg1: i32) -> (i32, i32) {
    %c1_i32 = arith.constant 1 : i32
    %0 = arith.muli %arg0, %c1_i32 : i32
    %1 = arith.addi %0, %arg1 : i32
    %c0_i32 = arith.constant 0 : i32
    %2 = arith.minsi %1, %c0_i32 : i32
    %c0_i32_0 = arith.constant 0 : i32
    %c0_i32_1 = arith.constant 0 : i32
    return %2, %c0_i32_0 : i32, i32
  }
  func.func @transform_1(%arg0: i32, %arg1: i32) -> (i32, i32) {
    %c1_i32 = arith.constant 1 : i32
    %0 = arith.muli %arg0, %c1_i32 : i32
    %1 = arith.addi %0, %arg1 : i32
    %c0_i32 = arith.constant 0 : i32
    %2 = arith.minsi %1, %c0_i32 : i32
    %c0_i32_0 = arith.constant 0 : i32
    %c0_i32_1 = arith.constant 0 : i32
    return %2, %c0_i32_0 : i32, i32
  }
  func.func @transform_2(%arg0: i32, %arg1: i32) -> (i32, i32) {
    %c0_i32 = arith.constant 0 : i32
    %c0_i32_0 = arith.constant 0 : i32
    return %arg0, %c0_i32 : i32, i32
  }
}

</mosaic_0001>

<llo_original>
// kernel: tpu_custom_call.1
$region0: #{tpu_custom_call.1}
  #allocation0 [shape = 'u32[]', space=smem, size = 0x4, offset = 0x4, fixed_abs, tag = 'smem constant byte address 0x4 - core index']
  #allocation1 [shape = 'u32[144,128]{1,0:T(1,128)}', space=vmem, size = 0x12000, scoped, tag = 'internal scratch']
  #allocation2 [shape = 'f32[8,128]{1,0:T(8,128)}', space=vmem, size = 0x1000, scoped, tag = 'scratch operand']
  %s0 = inlined_call_operand.hbm [shape: f32[16,128], index: 0, kind: input, shape index: {}]
  %s1 = inlined_call_operand.hbm [shape: f32[16,128], index: 1, kind: input, shape index: {}]
  %s2 = inlined_call_operand.hbm [shape: f32[1,1], index: 2, kind: output, shape index: {}]
  %s3 = sld [smem:[#allocation0]]
  $region38: #{tpu_custom_call.1} parent=0
    _
  %s5 = ssub.s32 1, %s3
  %s6 = scalar_select 0, %s5, %s3
  $region1: #{tpu_custom_call.1} parent=0
    #allocation3 [shape = 'u8[8192]{0}', space=vmem, size = 0x2000, scoped, tag = 'input window, operand 0, single buffered']
    #allocation4 [shape = 's32[1]{0}', space=sflag, size = 0x4, scoped, tag = 'scoped memory for tpu_custom_call.1']
    #allocation5 [shape = 's32[1]{0}', space=sflag, size = 0x4, scoped, tag = 'scoped memory for tpu_custom_call.1']
    #allocation6 [shape = 'u8[8192]{0}', space=vmem, size = 0x2000, scoped, tag = 'input window, operand 1, single buffered']
    #allocation7 [shape = 's32[1]{0}', space=sflag, size = 0x4, scoped, tag = 'scoped memory for tpu_custom_call.1']
    #allocation8 [shape = 'u8[512]{0}', space=smem, size = 0x200, scoped, tag = 'output window, operand 0, single buffered']
    %7 = vsyncpa [#allocation4], 0
    %8 = vsyncpa [#allocation7], 0
    %9 = vsyncpa [#allocation5], 0
    // Predicated region
    $region2: #{tpu_custom_call.1} parent=1 // pred_check
      _
    $region3: #{tpu_custom_call.1} parent=1 // pred_check_branch
      %11 = sbr.rel (0) target = $region5
    $region4: #{tpu_custom_call.1} parent=1 // pred_region
      %s12 = sadd.s32 0, 0
      %p13 = scmp.lt.s32.totalorder %s12, 0
      %s14 = scalar_select %p13, %s12, 0
      %s15 = smul.u32 2, %s14
      %s17 = ssub.s32 256, 256
      %18 = vsyncadd [#allocation4], %s17
      %s19 = smul.addr %s15, 128
      %s20 = scalar_lea.hbm %s0, %s19
      %s21 = sshll.u32 [#allocation3], 4
      %s22 = int_to_ptr.vmem [resolvable:$true] %s21
      %27 = dma.hbm_to_vmem [thread:$0]  %s20, 256, %s22, [#allocation4], 128, 128, 8
    $region5: #{tpu_custom_call.1} parent=1 // pred_fallthru
      _
    // Predicated region
    $region6: #{tpu_custom_call.1} parent=1 // pred_check
      _
    $region7: #{tpu_custom_call.1} parent=1 // pred_check_branch
      %29 = sbr.rel (0) target = $region9
    $region8: #{tpu_custom_call.1} parent=1 // pred_region
      %s30 = sadd.s32 0, 0
      %p31 = scmp.lt.s32.totalorder %s30, 0
      %s32 = scalar_select %p31, %s30, 0
      %s33 = smul.u32 2, %s32
      %s35 = ssub.s32 256, 256
      %36 = vsyncadd [#allocation7], %s35
      %s37 = smul.addr %s33, 128
      %s38 = scalar_lea.hbm %s1, %s37
      %s39 = sshll.u32 [#allocation6], 4
      %s40 = int_to_ptr.vmem [resolvable:$true] %s39
      %45 = dma.hbm_to_vmem [thread:$0]  %s38, 256, %s40, [#allocation7], 128, 128, 8
    $region9: #{tpu_custom_call.1} parent=1 // pred_fallthru
      _
    // Predicated region
    $region10: #{tpu_custom_call.1} parent=1 // pred_check
      _
    $region11: #{tpu_custom_call.1} parent=1 // pred_check_branch
      %47 = sbr.rel (0) target = $region13
    $region12: #{tpu_custom_call.1} parent=1 // pred_region
      %48 = dma.done [#allocation4], 256
    $region13: #{tpu_custom_call.1} parent=1 // pred_fallthru
      _
    // Predicated region
    $region14: #{tpu_custom_call.1} parent=1 // pred_check
      _
    $region15: #{tpu_custom_call.1} parent=1 // pred_check_branch
      %50 = sbr.rel (0) target = $region17
    $region16: #{tpu_custom_call.1} parent=1 // pred_region
      %51 = dma.done [#allocation7], 256
    $region17: #{tpu_custom_call.1} parent=1 // pred_fallthru
      _
    %s52 = sadd.s32 0, 0
    %p53 = scmp.lt.s32.totalorder %s52, 0
    %s54 = scalar_select %p53, %s52, 0
    %s55 = smul.u32 2, %s54
    %s56 = sadd.s32 0, 0
    %p57 = scmp.lt.s32.totalorder %s56, 0
    %s58 = scalar_select %p57, %s56, 0
    %s59 = smul.u32 2, %s58
    %s60 = sadd.s32 0, 0
    %p61 = scmp.eq.s32.totalorder 0, 0
    // Predicated region
    $region18: #{tpu_custom_call.1} parent=1 // pred_check
      %p62 = pneg %p61
    $region19: #{tpu_custom_call.1} parent=1 // pred_check_branch
      %64 = sbr.rel (%p62) target = $region21
    $region20: #{tpu_custom_call.1} parent=1 // pred_region
      %65 = vst [vmem:[#allocation2] sm:$0xff] 0.0
    $region21: #{tpu_custom_call.1} parent=1 // pred_fallthru
      _
    %p66 = scmp.le.s32.totalorder %s60, 0
    // Predicated region
    $region22: #{tpu_custom_call.1} parent=1 // pred_check
      %p67 = pneg %p66
    $region23: #{tpu_custom_call.1} parent=1 // pred_check_branch
      %69 = sbr.rel (%p67) target = $region25
    $region24: #{tpu_custom_call.1} parent=1 // pred_region
      %v70 = vld [vmem:[#allocation3] sm:$0xff]
      %v71 = vld [vmem:[#allocation3 + $0x8] sm:$0xff]
      %v72 = vld [vmem:[#allocation6] sm:$0xff]
      %v73 = vld [vmem:[#allocation6 + $0x8] sm:$0xff]
      %v74 = vadd.f32 %v70, 1.0
      %v75 = vlog2.pop %v74
      %v76 = vmul.f32 %v75, 0.6931472
      %v77 = vmul.f32 -0.5, %v70
      %v78 = vadd.f32 %v77, 1.0
      %v79 = vmul.f32 %v78, %v70
      %v80 = vand.u32 2147483647, %v70
      %vm81 = vcmp.lt.f32.partialorder %v80, 0.0004427343
      %v82 = vsel %vm81, %v79, %v76
      %v83 = vadd.f32 %v71, 1.0
      %v84 = vlog2.pop %v83
      %v85 = vmul.f32 %v84, 0.6931472
      %v86 = vmul.f32 -0.5, %v71
      %v87 = vadd.f32 %v86, 1.0
      %v88 = vmul.f32 %v87, %v71
      %v89 = vand.u32 2147483647, %v71
      %vm90 = vcmp.lt.f32.partialorder %v89, 0.0004427343
      %v91 = vsel %vm90, %v88, %v85
      %v92 = vadd.f32 %v72, 1.0
      %v93 = vlog2.pop %v92
      %v94 = vmul.f32 %v93, 0.6931472
      %v95 = vmul.f32 -0.5, %v72
      %v96 = vadd.f32 %v95, 1.0
      %v97 = vmul.f32 %v96, %v72
      %v98 = vand.u32 2147483647, %v72
      %vm99 = vcmp.lt.f32.partialorder %v98, 0.0004427343
      %v100 = vsel %vm99, %v97, %v94
      %v101 = vadd.f32 %v73, 1.0
      %v102 = vlog2.pop %v101
      %v103 = vmul.f32 %v102, 0.6931472
      %v104 = vmul.f32 -0.5, %v73
      %v105 = vadd.f32 %v104, 1.0
      %v106 = vmul.f32 %v105, %v73
      %v107 = vand.u32 2147483647, %v73
      %vm108 = vcmp.lt.f32.partialorder %v107, 0.0004427343
      %v109 = vsel %vm108, %v106, %v103
      %v110 = vsub.f32 %v82, %v100
      %v111 = vsub.f32 %v91, %v109
      %v112 = vmul.f32 %v110, %v110
      %v113 = vmul.f32 %v111, %v111
      %v114 = vld [vmem:[#allocation2] sm:$0xff]
      %v115 = vadd.f32 %v112, %v113
      %v116 = vadd.f32 %v114, %v115
      %117 = vst [vmem:[#allocation2] sm:$0xff] %v116
    $region25: #{tpu_custom_call.1} parent=1 // pred_fallthru
      _
    // Predicated region
    $region26: #{tpu_custom_call.1} parent=1 // pred_check
      %p118 = pneg %p61
    $region27: #{tpu_custom_call.1} parent=1 // pred_check_branch
      %120 = sbr.rel (%p118) target = $region29
    $region28: #{tpu_custom_call.1} parent=1 // pred_region
      %v121 = vld [vmem:[#allocation2] sm:$0xff]
      %122 = vadd.xlane.f32.xlu0 %v121
      %v123 = vpop.xlane.xlu0 %122
      %v124 = vrot.slane %v123, 4
      %v125 = vadd.f32 %v123, %v124
      %v126 = vrot.slane %v125, 2
      %v127 = vadd.f32 %v125, %v126
      %v128 = vrot.slane %v127, 1
      %v129 = vadd.f32 %v127, %v128
      %s130 = vtos %v129
      %s131 = scalar_lea.smem [#allocation8], 0
      %132 = sst [smem:[%s131]] %s130
    $region29: #{tpu_custom_call.1} parent=1 // pred_fallthru
      _
    // Predicated region
    $region30: #{tpu_custom_call.1} parent=1 // pred_check
      _
    $region31: #{tpu_custom_call.1} parent=1 // pred_check_branch
      %134 = sbr.rel (0) target = $region33
    $region32: #{tpu_custom_call.1} parent=1 // pred_region
      %s136 = ssub.s32 16, 16
      %137 = vsyncadd [#allocation5], %s136
      %140 = dma.smem_to_hbm [#allocation8], 16, %s2, [#allocation5]
    $region33: #{tpu_custom_call.1} parent=1 // pred_fallthru
      _
    // Predicated region
    $region34: #{tpu_custom_call.1} parent=1 // pred_check
      _
    $region35: #{tpu_custom_call.1} parent=1 // pred_check_branch
      %142 = sbr.rel (0) target = $region37
    $region36: #{tpu_custom_call.1} parent=1 // pred_region
      %143 = dma.done [#allocation5], 16
    $region37: #{tpu_custom_call.1} parent=1 // pred_fallthru
      _
    %144 = sfence
    %145 = vsyncpa [#allocation4], 1
    %146 = vsyncpa [#allocation7], 1
    %147 = vsyncpa [#allocation5], 1

</llo_original>
